<compile_context>
chip_gen: v6e
topology: v6e:2x2x1
jax: 0.10.0
libtpu: 0.0.40
codegen_flags: <defaults>
</compile_context>

<pallas_src>
import math

import jax
import jax.numpy as jnp
from jax.experimental import pallas as pl
from jax.experimental.pallas import tpu as pltpu

_LANE = 128


def _minmax_scale_kernel(x_ref, min_ref, max_ref, o_ref):
    mn = min_ref[...]                       # [1, F]
    # Exact divide only on the tiny [1, F] tile; per-element work is then a
    # subtract + multiply on the VPU (no per-element f32 divide).
    inv = 1.0 / (max_ref[...] - mn)         # [1, F]
    o_ref[...] = (x_ref[...] - mn) * inv    # [TB, F]


def _tiled_scale_2d(x2, min_row, max_row):
    """Tiled Pallas call on a 2-D [B, F] view; min_row/max_row are [F]."""
    B, F = x2.shape
    mn2 = min_row.reshape(1, F).astype(x2.dtype)
    mx2 = max_row.reshape(1, F).astype(x2.dtype)

    # Batch tile: target <=1024 rows, multiple of 8, and keep the
    # double-buffered footprint (2 bufs x (in + out) tile) well under the
    # scoped-VMEM budget on every chip generation:
    #   4 * TB * F * itemsize <= ~16 MiB.
    itemsize = x2.dtype.itemsize
    budget_bytes = 16 * 1024 * 1024
    max_rows = max(8, budget_bytes // max(4 * F * itemsize, 1))
    TB = min(B, 1024, max_rows)
    if TB < B:
        TB = max(8, (TB // 8) * 8)          # keep the (8, 128) tiling rule
    grid = (pl.cdiv(B, TB),)

    return pl.pallas_call(
        _minmax_scale_kernel,
        out_shape=jax.ShapeDtypeStruct((B, F), x2.dtype),
        grid=grid,
        in_specs=[
            pl.BlockSpec((TB, F), lambda i: (i, 0)),
            pl.BlockSpec((1, F), lambda i: (0, 0)),   # resident across grid
            pl.BlockSpec((1, F), lambda i: (0, 0)),   # resident across grid
        ],
        out_specs=pl.BlockSpec((TB, F), lambda i: (i, 0)),
        compiler_params=pltpu.CompilerParams(
            dimension_semantics=("parallel",),        # 2-TC sharding on v7x
            vmem_limit_bytes=32 * 1024 * 1024,        # explicit, v7x-safe
        ),
    )(x2, mn2, mx2)


def minmax_scale(x, min_vals, max_vals):
    """Pallas equivalent of MinMaxScalerLayer.forward.

    x:        [..., F] float array (leading dims are flattened internally)
    min_vals: [F]
    max_vals: [F]
    returns   same shape/dtype as x
    """
    orig_shape = x.shape
    F = orig_shape[-1]
    B = int(math.prod(orig_shape[:-1])) if len(orig_shape) > 1 else 1
    x2 = x.reshape(B, F)

    # Lane-density fix-up: pack `pack` consecutive rows so the last dim is a
    # multiple of 128 lanes (unmasked stores), when the batch divides evenly.
    if F % _LANE != 0:
        pack = _LANE // math.gcd(F, _LANE)
        if pack > 1 and B >= pack and B % pack == 0:
            xp = x2.reshape(B // pack, pack * F)
            mnp = jnp.tile(min_vals, pack)
            mxp = jnp.tile(max_vals, pack)
            outp = _tiled_scale_2d(xp, mnp, mxp)
            return outp.reshape(orig_shape)

    # Fallback: full-F blocks (last dim equals the array dim, so any F is OK).
    out2 = _tiled_scale_2d(x2, min_vals, max_vals)
    return out2.reshape(orig_shape)


if __name__ == "__main__":
    key = jax.random.PRNGKey(0)
    batch, input_size = 2, 32

    x = jax.random.normal(key, (batch, input_size), dtype=jnp.float32)

    # Buffers exactly as in MinMaxScalerLayer.__init__ (deterministic):
    #   min_vals = zeros(input_size), max_vals = ones(input_size)
    min_vals = jnp.zeros((input_size,), dtype=jnp.float32)
    max_vals = jnp.ones((input_size,), dtype=jnp.float32)

    out = minmax_scale(x, min_vals, max_vals)
    out = jax.block_until_ready(out)

    # Reference check against plain-JAX semantics of the PyTorch forward.
    ref = (x - min_vals) / (max_vals - min_vals)
    assert out.shape == ref.shape, "shape mismatch vs reference"
    assert jnp.allclose(out, ref, atol=1e-6), "mismatch vs reference"

    print("KERNEL_OK")
</pallas_src>

<mosaic_0001>
module attributes {stable_mosaic.version = 11 : i64} {
  func.func @_minmax_scale_kernel(%arg0: i32, %arg1: memref<2x32xf32, #tpu.memory_space<vmem>>, %arg2: memref<1x32xf32, #tpu.memory_space<vmem>>, %arg3: memref<1x32xf32, #tpu.memory_space<vmem>>, %arg4: memref<2x32xf32, #tpu.memory_space<vmem>>) attributes {dimension_semantics = [#tpu.dimension_semantics<parallel>], iteration_bounds = array<i64: 1>, scalar_prefetch = 0 : i64, scratch_operands = 0 : i64, tpu.core_type = #tpu.core_type<tc>, window_params = [{transform_indices = @transform_0, window_bounds = array<i64: 2, 32>}, {pipeline_mode = #tpu.pipeline_mode<synchronous>, transform_indices = @transform_1, window_bounds = array<i64: 1, 32>}, {pipeline_mode = #tpu.pipeline_mode<synchronous>, transform_indices = @transform_2, window_bounds = array<i64: 1, 32>}, {transform_indices = @transform_3, window_bounds = array<i64: 2, 32>}]} {
    %c0 = arith.constant 0 : index
    %c0_0 = arith.constant 0 : index
    %0 = vector.load %arg2[%c0, %c0_0] : memref<1x32xf32, #tpu.memory_space<vmem>>, vector<1x32xf32>
    %c0_1 = arith.constant 0 : index
    %c0_2 = arith.constant 0 : index
    %1 = vector.load %arg3[%c0_1, %c0_2] : memref<1x32xf32, #tpu.memory_space<vmem>>, vector<1x32xf32>
    %2 = arith.subf %1, %0 : vector<1x32xf32>
    %cst = arith.constant 1.000000e+00 : f32
    %3 = vector.broadcast %cst : f32 to vector<1x32xf32>
    %4 = arith.divf %3, %2 : vector<1x32xf32>
    %c0_3 = arith.constant 0 : index
    %c0_4 = arith.constant 0 : index
    %5 = vector.load %arg1[%c0_3, %c0_4] : memref<2x32xf32, #tpu.memory_space<vmem>>, vector<2x32xf32>
    %6 = vector.broadcast %0 : vector<1x32xf32> to vector<2x32xf32>
    %7 = arith.subf %5, %6 : vector<2x32xf32>
    %8 = vector.broadcast %4 : vector<1x32xf32> to vector<2x32xf32>
    %9 = arith.mulf %7, %8 : vector<2x32xf32>
    %c0_5 = arith.constant 0 : index
    %c0_6 = arith.constant 0 : index
    %10 = vector.load %arg4[%c0_5, %c0_6] : memref<2x32xf32, #tpu.memory_space<vmem>>, vector<2x32xf32>
    tpu.vector_store %arg4[%c0_5, %c0_6], %9 {strides = array<i32>} : memref<2x32xf32, #tpu.memory_space<vmem>>, vector<2x32xf32>,
    return
  }
  func.func @transform_0(%arg0: i32) -> (i32, i32) {
    %c0_i32 = arith.constant 0 : i32
    %c0_i32_0 = arith.constant 0 : i32
    return %arg0, %c0_i32 : i32, i32
  }
  func.func @transform_1(%arg0: i32) -> (i32, i32) {
    %c0_i32 = arith.constant 0 : i32
    %c0_i32_0 = arith.constant 0 : i32
    %c0_i32_1 = arith.constant 0 : i32
    return %c0_i32, %c0_i32_0 : i32, i32
  }
  func.func @transform_2(%arg0: i32) -> (i32, i32) {
    %c0_i32 = arith.constant 0 : i32
    %c0_i32_0 = arith.constant 0 : i32
    %c0_i32_1 = arith.constant 0 : i32
    return %c0_i32, %c0_i32_0 : i32, i32
  }
  func.func @transform_3(%arg0: i32) -> (i32, i32) {
    %c0_i32 = arith.constant 0 : i32
    %c0_i32_0 = arith.constant 0 : i32
    return %arg0, %c0_i32 : i32, i32
  }
}

</mosaic_0001>

<llo_original>
// kernel: tpu_custom_call.1
$region0: #{tpu_custom_call.1}
  #allocation0 [shape = 'u32[]', space=smem, size = 0x4, offset = 0x4, fixed_abs, tag = 'smem constant byte address 0x4 - core index']
  #allocation1 [shape = 'u32[144,128]{1,0:T(1,128)}', space=vmem, size = 0x12000, scoped, tag = 'internal scratch']
  %s0 = inlined_call_operand.hbm [shape: f32[2,32], index: 0, kind: input, shape index: {}]
  %s1 = inlined_call_operand.vmem [shape: f32[1,32], index: 1, kind: input, shape index: {}]
  %s2 = inlined_call_operand.vmem [shape: f32[1,32], index: 2, kind: input, shape index: {}]
  %s3 = inlined_call_operand.hbm [shape: f32[2,32], index: 3, kind: output, shape index: {}]
  %s4 = sld [smem:[#allocation0]]
  $region26: #{tpu_custom_call.1} parent=0
    _
  %s6 = ssub.s32 1, %s4
  %s7 = scalar_select 0, %s6, %s4
  $region1: #{tpu_custom_call.1} parent=0
    #allocation2 [shape = 'u8[1024]{0}', space=vmem, size = 0x400, scoped, tag = 'input window, operand 0, single buffered']
    #allocation3 [shape = 's32[1]{0}', space=sflag, size = 0x4, scoped, tag = 'scoped memory for tpu_custom_call.1']
    #allocation4 [shape = 's32[1]{0}', space=sflag, size = 0x4, scoped, tag = 'scoped memory for tpu_custom_call.1']
    #allocation5 [shape = 'u8[1024]{0}', space=vmem, size = 0x400, scoped, tag = 'output window, operand 0, single buffered']
    %8 = vsyncpa [#allocation3], 0
    %9 = vsyncpa [#allocation4], 0
    // Predicated region
    $region2: #{tpu_custom_call.1} parent=1 // pred_check
      _
    $region3: #{tpu_custom_call.1} parent=1 // pred_check_branch
      %11 = sbr.rel (0) target = $region5
    $region4: #{tpu_custom_call.1} parent=1 // pred_region
      %s13 = ssub.s32 32, 32
      %14 = vsyncadd [#allocation3], %s13
      %s16 = sshll.u32 [#allocation2], 4
      %s17 = int_to_ptr.vmem [resolvable:$true] %s16
      %19 = dma.hbm_to_vmem [thread:$0]  %s0, 32, %s17, [#allocation3]
    $region5: #{tpu_custom_call.1} parent=1 // pred_fallthru
      _
    // Predicated region
    $region6: #{tpu_custom_call.1} parent=1 // pred_check
      _
    $region7: #{tpu_custom_call.1} parent=1 // pred_check_branch
      %21 = sbr.rel (0) target = $region9
    $region8: #{tpu_custom_call.1} parent=1 // pred_region
      _
    $region9: #{tpu_custom_call.1} parent=1 // pred_fallthru
      _
    // Predicated region
    $region10: #{tpu_custom_call.1} parent=1 // pred_check
      _
    $region11: #{tpu_custom_call.1} parent=1 // pred_check_branch
      %23 = sbr.rel (0) target = $region13
    $region12: #{tpu_custom_call.1} parent=1 // pred_region
      _
    $region13: #{tpu_custom_call.1} parent=1 // pred_fallthru
      _
    // Predicated region
    $region14: #{tpu_custom_call.1} parent=1 // pred_check
      _
    $region15: #{tpu_custom_call.1} parent=1 // pred_check_branch
      %25 = sbr.rel (0) target = $region17
    $region16: #{tpu_custom_call.1} parent=1 // pred_region
      %26 = dma.done [#allocation3], 32
    $region17: #{tpu_custom_call.1} parent=1 // pred_fallthru
      _
    %v27 = vld [vmem:[%s1] sm:$0x1]
    %v28 = vld [vmem:[%s2] sm:$0x1]
    %v29 = vsub.f32 %v28, %v27
    %v30 = vrcp.pop %v29
    %v31 = vmul.f32 1.0, %v30
    %v32 = vld [vmem:[#allocation2] sm:$0x3]
    %v34 = vlaneseq
    %v35 = vshrl.u32 %v34, 7
    %v36 = vsub.s32 0, %v35
    %v37 = vrot.slane %v27, %v36
    %v39 = vsub.f32 %v32, %v37
    %v41 = vlaneseq
    %v42 = vshrl.u32 %v41, 7
    %v43 = vsub.s32 0, %v42
    %v44 = vrot.slane %v31, %v43
    %v46 = vmul.f32 %v39, %v44
    %vm47 = vcmask 254976
    %48 = vst.msk [vmem:[#allocation5] sm:$0x3] %vm47, %v46
    // Predicated region
    $region18: #{tpu_custom_call.1} parent=1 // pred_check
      _
    $region19: #{tpu_custom_call.1} parent=1 // pred_check_branch
      %50 = sbr.rel (0) target = $region21
    $region20: #{tpu_custom_call.1} parent=1 // pred_region
      %s52 = ssub.s32 32, 32
      %53 = vsyncadd [#allocation4], %s52
      %s55 = sshll.u32 [#allocation5], 4
      %s56 = int_to_ptr.vmem [resolvable:$true] %s55
      %58 = dma.vmem_to_hbm [thread:$0]  %s56, 32, %s3, [#allocation4]
    $region21: #{tpu_custom_call.1} parent=1 // pred_fallthru
      _
    // Predicated region
    $region22: #{tpu_custom_call.1} parent=1 // pred_check
      _
    $region23: #{tpu_custom_call.1} parent=1 // pred_check_branch
      %60 = sbr.rel (0) target = $region25
    $region24: #{tpu_custom_call.1} parent=1 // pred_region
      %61 = dma.done [#allocation4], 32
    $region25: #{tpu_custom_call.1} parent=1 // pred_fallthru
      _
    %62 = vsyncpa [#allocation3], 1
    %63 = vsyncpa [#allocation4], 1

</llo_original>
